<compile_context>
chip_gen: v7x
topology: tpu7x:2x2x1
jax: 0.10.0
libtpu: 0.0.40
codegen_flags: <defaults>
</compile_context>

<pallas_src>
import jax
import jax.numpy as jnp
from jax.experimental import pallas as pl
from jax.experimental.pallas import tpu as pltpu


def _round_up(x, m):
    return ((x + m - 1) // m) * m


def _patch_embed_kernel(p_ref, w_ref, b_ref, o_ref):
    # p_ref: (tm, K) bf16 patch rows
    # w_ref: (K, Np) bf16 projection weight (constant index_map -> resident)
    # b_ref: (1, Np) f32 bias
    # o_ref: (tm, Np) output (input dtype)
    acc = jnp.dot(p_ref[...], w_ref[...], preferred_element_type=jnp.float32)
    o_ref[...] = (acc + b_ref[...]).astype(o_ref.dtype)


def patch_embed(x, weight, bias, patch_size, stride, *, tm=256,
                compute_dtype=jnp.bfloat16):
    """x: (B, C, H, W); weight: (embed_dim, C, p, p) (PyTorch Conv2d layout);
       bias: (embed_dim,). Returns (B, num_patches, embed_dim)."""
    B, C, H, W = x.shape
    p = patch_size
    assert stride == p, "kernel assumes non-overlapping patches (stride == patch_size)"
    gh = (H - p) // stride + 1
    gw = (W - p) // stride + 1
    num_patches = gh * gw
    embed_dim = weight.shape[0]
    K = C * p * p
    M = B * num_patches

    # ---- layout glue: extract non-overlapping patches in conv (C, ph, pw) order.
    # With allow_input_fusion=[0] XLA fuses this chain into the kernel's input DMA
    # instead of materializing the (M, K) patch tensor in HBM.
    xp = x.reshape(B, C, gh, p, gw, p)
    xp = jnp.transpose(xp, (0, 2, 4, 1, 3, 5))            # (B, gh, gw, C, p, p)
    patches = xp.reshape(M, K).astype(compute_dtype)      # (M, K)

    # Pad the lane (N) dim to a multiple of 128 -> unmasked, lane-dense stores.
    Np = _round_up(embed_dim, 128)
    w2d = weight.reshape(embed_dim, K).T.astype(compute_dtype)   # (K, N)
    b2d = bias.astype(jnp.float32).reshape(1, embed_dim)
    if Np != embed_dim:
        w2d = jnp.pad(w2d, ((0, 0), (0, Np - embed_dim)))
        b2d = jnp.pad(b2d, ((0, 0), (0, Np - embed_dim)))

    # Row tile: big enough to fill the MXU, clamped for tiny problems, and pad
    # M up to a tile multiple instead of asserting divisibility.
    tm_eff = max(8, min(tm, _round_up(M, 8)))
    Mp = _round_up(M, tm_eff)
    if Mp != M:
        patches = jnp.pad(patches, ((0, Mp - M), (0, 0)))

    grid = (Mp // tm_eff,)

    in_itemsize = jnp.dtype(compute_dtype).itemsize
    out_itemsize = jnp.dtype(x.dtype).itemsize
    # Per-step VMEM (conservative: assume everything double-buffered).
    vmem_est = (2 * tm_eff * K * in_itemsize            # activation tiles
                + 2 * tm_eff * Np * out_itemsize        # output tiles
                + 2 * (K * Np * in_itemsize + Np * 4))  # resident weight + bias
    compiler_kwargs = dict(dimension_semantics=("parallel",),
                           allow_input_fusion=[0])
    if vmem_est > (32 << 20):
        # Keep under v7x's 64 MiB physical VMEM; for very large embed_dim, tile N
        # instead of raising further.
        compiler_kwargs["vmem_limit_bytes"] = min(int(vmem_est * 3 // 2), 60 << 20)

    cost = pl.CostEstimate(
        flops=2 * Mp * K * Np,
        transcendentals=0,
        bytes_accessed=(Mp * K * in_itemsize + K * Np * in_itemsize
                        + Np * 4 + Mp * Np * out_itemsize),
    )

    out = pl.pallas_call(
        _patch_embed_kernel,
        out_shape=jax.ShapeDtypeStruct((Mp, Np), x.dtype),
        grid_spec=pltpu.PrefetchScalarGridSpec(
            num_scalar_prefetch=0,
            grid=grid,
            in_specs=[
                pl.BlockSpec((tm_eff, K), lambda i: (i, 0)),
                pl.BlockSpec((K, Np), lambda i: (0, 0)),   # weight: resident
                pl.BlockSpec((1, Np), lambda i: (0, 0)),   # bias: resident
            ],
            out_specs=pl.BlockSpec((tm_eff, Np), lambda i: (i, 0)),
        ),
        compiler_params=pltpu.CompilerParams(**compiler_kwargs),
        cost_estimate=cost,
    )(patches, w2d, b2d)

    out = out[:M, :embed_dim]                  # strip M / lane padding
    return out.reshape(B, num_patches, embed_dim)


if __name__ == "__main__":
    # Small config consistent with the module: img 16x16, patch 4, stride 4,
    # in_chans 4, embed_dim 32, batch 2 -> 16 patches per image.
    B, C, H, W = 2, 4, 16, 16
    patch_size = 4
    stride = 4
    embed_dim = 32

    key = jax.random.PRNGKey(0)
    kx, kw, kb = jax.random.split(key, 3)
    x = jax.random.normal(kx, (B, C, H, W), dtype=jnp.float32)
    weight = jax.random.normal(kw, (embed_dim, C, patch_size, patch_size),
                               dtype=jnp.float32) * 0.02
    bias = jax.random.normal(kb, (embed_dim,), dtype=jnp.float32) * 0.02

    y = patch_embed(x, weight, bias, patch_size, stride)
    y = jax.block_until_ready(y)

    # Reference: fp32 lax.conv (same semantics as nn.Conv2d) + flatten/transpose.
    ref = jax.lax.conv_general_dilated(
        x, weight, window_strides=(stride, stride), padding="VALID",
        dimension_numbers=("NCHW", "OIHW", "NCHW"))
    ref = ref + bias[None, :, None, None]
    ref = jnp.transpose(ref.reshape(B, embed_dim, -1), (0, 2, 1))

    assert y.shape == (B, (H // stride) * (W // stride), embed_dim)
    # bf16 operands with f32 accumulation -> relaxed tolerance vs fp32 reference.
    assert jnp.allclose(y, ref, atol=2e-2, rtol=2e-2)

    # norm = Identity (default norm_layer=None), so no extra work.
    print("KERNEL_OK")
</pallas_src>

<mosaic_0001>
module attributes {stable_mosaic.version = 11 : i64} {
  func.func @_patch_embed_kernel(%arg0: i32, %arg1: memref<32x64xbf16, #tpu.memory_space<vmem>>, %arg2: memref<64x128xbf16, #tpu.memory_space<vmem>>, %arg3: memref<1x128xf32, #tpu.memory_space<vmem>>, %arg4: memref<32x128xf32, #tpu.memory_space<vmem>>) attributes {dimension_semantics = [#tpu.dimension_semantics<parallel>], iteration_bounds = array<i64: 1>, scalar_prefetch = 0 : i64, scratch_operands = 0 : i64, tpu.core_type = #tpu.core_type<tc>, window_params = [{transform_indices = @transform_0, window_bounds = array<i64: 32, 64>}, {pipeline_mode = #tpu.pipeline_mode<synchronous>, transform_indices = @transform_1, window_bounds = array<i64: 64, 128>}, {pipeline_mode = #tpu.pipeline_mode<synchronous>, transform_indices = @transform_2, window_bounds = array<i64: 1, 128>}, {transform_indices = @transform_3, window_bounds = array<i64: 32, 128>}]} {
    %c0 = arith.constant 0 : index
    %c0_0 = arith.constant 0 : index
    %0 = vector.load %arg1[%c0, %c0_0] : memref<32x64xbf16, #tpu.memory_space<vmem>>, vector<32x64xbf16>
    %c0_1 = arith.constant 0 : index
    %c0_2 = arith.constant 0 : index
    %1 = vector.load %arg2[%c0_1, %c0_2] : memref<64x128xbf16, #tpu.memory_space<vmem>>, vector<64x128xbf16>
    %cst = arith.constant dense<0.000000e+00> : vector<32x128xf32>
    %2 = tpu.matmul %0, %1, %cst {dimension_numbers = #tpu.dot_dimension_numbers<[1], [0], [0], [1], [0, 0, 1, 1], [], []>} : vector<32x64xbf16>, vector<64x128xbf16>, vector<32x128xf32> -> vector<32x128xf32>
    %c0_3 = arith.constant 0 : index
    %c0_4 = arith.constant 0 : index
    %3 = vector.load %arg3[%c0_3, %c0_4] : memref<1x128xf32, #tpu.memory_space<vmem>>, vector<1x128xf32>
    %4 = vector.broadcast %3 : vector<1x128xf32> to vector<32x128xf32>
    %5 = arith.addf %2, %4 : vector<32x128xf32>
    %c0_5 = arith.constant 0 : index
    %c0_6 = arith.constant 0 : index
    %6 = vector.load %arg4[%c0_5, %c0_6] : memref<32x128xf32, #tpu.memory_space<vmem>>, vector<32x128xf32>
    tpu.vector_store %arg4[%c0_5, %c0_6], %5 {strides = array<i32>} : memref<32x128xf32, #tpu.memory_space<vmem>>, vector<32x128xf32>,
    return
  }
  func.func @transform_0(%arg0: i32) -> (i32, i32) {
    %c0_i32 = arith.constant 0 : i32
    %c0_i32_0 = arith.constant 0 : i32
    return %arg0, %c0_i32 : i32, i32
  }
  func.func @transform_1(%arg0: i32) -> (i32, i32) {
    %c0_i32 = arith.constant 0 : i32
    %c0_i32_0 = arith.constant 0 : i32
    %c0_i32_1 = arith.constant 0 : i32
    return %c0_i32, %c0_i32_0 : i32, i32
  }
  func.func @transform_2(%arg0: i32) -> (i32, i32) {
    %c0_i32 = arith.constant 0 : i32
    %c0_i32_0 = arith.constant 0 : i32
    %c0_i32_1 = arith.constant 0 : i32
    return %c0_i32, %c0_i32_0 : i32, i32
  }
  func.func @transform_3(%arg0: i32) -> (i32, i32) {
    %c0_i32 = arith.constant 0 : i32
    %c0_i32_0 = arith.constant 0 : i32
    return %arg0, %c0_i32 : i32, i32
  }
}

</mosaic_0001>

<llo_original>
// kernel: tpu_custom_call.1
$region0: #{tpu_custom_call.1}
  #allocation0 [shape = 'u32[]', space=smem, size = 0x4, offset = 0x4, fixed_abs, tag = 'smem constant byte address 0x4 - core index']
  #allocation1 [shape = 'u32[144,128]{1,0:T(1,128)}', space=vmem, size = 0x12000, scoped, tag = 'internal scratch']
  %s0 = inlined_call_operand.hbm [shape: bf16[32,64], index: 0, kind: input, shape index: {}]
  %s1 = inlined_call_operand.hbm [shape: bf16[64,128], index: 1, kind: input, shape index: {}]
  %s2 = inlined_call_operand.vmem [shape: f32[1,128], index: 2, kind: input, shape index: {}]
  %s3 = inlined_call_operand.hbm [shape: f32[32,128], index: 3, kind: output, shape index: {}]
  %s4 = sld [smem:[#allocation0]]
  $region30: #{tpu_custom_call.1} parent=0
    _
  %s6 = ssub.s32 1, %s4
  %s7 = scalar_select 0, %s6, %s4
  $region1: #{tpu_custom_call.1} parent=0
    #allocation2 [shape = 'u8[8192]{0}', space=vmem, size = 0x2000, scoped, tag = 'input window, operand 0, single buffered']
    #allocation3 [shape = 's32[1]{0}', space=sflag, size = 0x4, scoped, tag = 'scoped memory for tpu_custom_call.1']
    #allocation4 [shape = 's32[1]{0}', space=sflag, size = 0x4, scoped, tag = 'scoped memory for tpu_custom_call.1']
    #allocation5 [shape = 'u8[16384]{0}', space=vmem, size = 0x4000, scoped, tag = 'input window, operand 1, single buffered']
    #allocation6 [shape = 's32[1]{0}', space=sflag, size = 0x4, scoped, tag = 'scoped memory for tpu_custom_call.1']
    #allocation7 [shape = 'u8[16384]{0}', space=vmem, size = 0x4000, scoped, tag = 'output window, operand 0, single buffered']
    %8 = vsyncpa [#allocation3], 0
    %9 = vsyncpa [#allocation6], 0
    %10 = vsyncpa [#allocation4], 0
    // Predicated region
    $region2: #{tpu_custom_call.1} parent=1 // pred_check
      _
    $region3: #{tpu_custom_call.1} parent=1 // pred_check_branch
      %12 = sbr.rel (0) target = $region5
    $region4: #{tpu_custom_call.1} parent=1 // pred_region
      %s14 = ssub.s32 256, 256
      %15 = vsyncadd [#allocation3], %s14
      %s16 = sshll.u32 [#allocation2], 4
      %s17 = int_to_ptr.vmem [resolvable:$true] %s16
      %22 = dma.hbm_to_vmem [thread:$0]  %s0, 256, %s17, [#allocation3], 64, 64, 4
    $region5: #{tpu_custom_call.1} parent=1 // pred_fallthru
      _
    // Predicated region
    $region6: #{tpu_custom_call.1} parent=1 // pred_check
      _
    $region7: #{tpu_custom_call.1} parent=1 // pred_check_branch
      %24 = sbr.rel (0) target = $region9
    $region8: #{tpu_custom_call.1} parent=1 // pred_region
      %s26 = ssub.s32 512, 512
      %27 = vsyncadd [#allocation6], %s26
      %s28 = sshll.u32 [#allocation5], 4
      %s29 = int_to_ptr.vmem [resolvable:$true] %s28
      %34 = dma.hbm_to_vmem [thread:$0]  %s1, 512, %s29, [#allocation6], 64, 64, 4
    $region9: #{tpu_custom_call.1} parent=1 // pred_fallthru
      _
    // Predicated region
    $region10: #{tpu_custom_call.1} parent=1 // pred_check
      _
    $region11: #{tpu_custom_call.1} parent=1 // pred_check_branch
      %36 = sbr.rel (0) target = $region13
    $region12: #{tpu_custom_call.1} parent=1 // pred_region
      _
    $region13: #{tpu_custom_call.1} parent=1 // pred_fallthru
      _
    // Predicated region
    $region14: #{tpu_custom_call.1} parent=1 // pred_check
      _
    $region15: #{tpu_custom_call.1} parent=1 // pred_check_branch
      %38 = sbr.rel (0) target = $region17
    $region16: #{tpu_custom_call.1} parent=1 // pred_region
      %39 = dma.done [#allocation3], 256
    $region17: #{tpu_custom_call.1} parent=1 // pred_fallthru
      _
    // Predicated region
    $region18: #{tpu_custom_call.1} parent=1 // pred_check
      _
    $region19: #{tpu_custom_call.1} parent=1 // pred_check_branch
      %41 = sbr.rel (0) target = $region21
    $region20: #{tpu_custom_call.1} parent=1 // pred_region
      %42 = dma.done [#allocation6], 512
    $region21: #{tpu_custom_call.1} parent=1 // pred_fallthru
      _
    %v44 = vld [vmem:[#allocation2] sm:$0xf]
    %v45 = vld [vmem:[#allocation2 + $0x4] sm:$0xf]
    %v46 = vld [vmem:[#allocation2 + $0x8] sm:$0xf]
    %v47 = vld [vmem:[#allocation2 + $0xc] sm:$0xf]
    %v48 = vld [vmem:[#allocation5] sm:$0xf]
    %v49 = vld [vmem:[#allocation5 + $0x4] sm:$0xf]
    %v50 = vld [vmem:[#allocation5 + $0x8] sm:$0xf]
    %v51 = vld [vmem:[#allocation5 + $0xc] sm:$0xf]
    %v52 = vld [vmem:[#allocation5 + $0x10] sm:$0xf]
    %v53 = vld [vmem:[#allocation5 + $0x14] sm:$0xf]
    %v54 = vld [vmem:[#allocation5 + $0x18] sm:$0xf]
    %v55 = vld [vmem:[#allocation5 + $0x1c] sm:$0xf]
    %v56 = vld [vmem:[%s2] sm:$0x1]
    %v58 = vlaneseq
    %v59 = vshrl.u32 %v58, 7
    %v60 = vsub.s32 0, %v59
    %v61 = vrot.slane %v56, %v60
    %v67 = vunpack.c.l.b16 %v44
    %v68 = vunpack.c.l.b16 %v45
    %v69 = vunpack.c.l.b16 %v46
    %v70 = vunpack.c.l.b16 %v47
    %v71 = vpack.c.b16 %v68, %v67
    %v72 = vpack.c.b16 %v70, %v69
    %v81 = vunpack.c.l.b16 %v48
    %v82 = vunpack.c.l.b16 %v49
    %v83 = vunpack.c.l.b16 %v50
    %v84 = vunpack.c.l.b16 %v51
    %v85 = vunpack.c.l.b16 %v52
    %v86 = vunpack.c.l.b16 %v53
    %v87 = vunpack.c.l.b16 %v54
    %v88 = vunpack.c.l.b16 %v55
    %v89 = vpack.c.b16 %v82, %v81
    %v90 = vpack.c.b16 %v84, %v83
    %v91 = vpack.c.b16 %v86, %v85
    %v92 = vpack.c.b16 %v88, %v87
    %vm97 = vcmask 523264
    %v99 = vsel %vm97, %v71, 0
    %v102 = vsel %vm97, %v72, 0
    %104 = vmatprep.subr.bf16.mxu0 0
    %105 = vmatpush1.bf16.msra.mxu0 %v89
    %106 = vmatprep.subr.bf16.mxu0 0
    %107 = vmatpush1.bf16.msra.mxu0 %v90
    %108 = vmatprep.subr.bf16.mxu0 0
    %109 = vmatpush1.bf16.msra.mxu0 %v91
    %110 = vmatprep.subr.bf16.mxu0 0
    %111 = vmatpush1.bf16.msra.mxu0 %v92
    %112 = vmatprep.subr.bf16.mxu0 0
    %113 = vmatpush1.bf16.msra.mxu0 0
    %114 = vmatprep.subr.bf16.mxu0 0
    %115 = vmatpush1.bf16.msra.mxu0 0
    %116 = vmatprep.subr.bf16.mxu0 0
    %117 = vmatpush1.bf16.msra.mxu0 0
    %118 = vmatprep.subr.bf16.mxu0 0
    %119 = vmatpush1.bf16.msra.mxu0 0
    %120 = vmatprep.subr.bf16.mxu0 0
    %121 = vmatpush1.bf16.msra.mxu0 0
    %122 = vmatprep.subr.bf16.mxu0 0
    %123 = vmatpush1.bf16.msra.mxu0 0
    %124 = vmatprep.subr.bf16.mxu0 0
    %125 = vmatpush1.bf16.msra.mxu0 0
    %126 = vmatprep.subr.bf16.mxu0 0
    %127 = vmatpush1.bf16.msra.mxu0 0
    %128 = vmatprep.subr.bf16.mxu0 0
    %129 = vmatpush1.bf16.msra.mxu0 0
    %130 = vmatprep.subr.bf16.mxu0 0
    %131 = vmatpush1.bf16.msra.mxu0 0
    %132 = vmatprep.subr.bf16.mxu0 0
    %133 = vmatpush1.bf16.msra.mxu0 0
    %134 = vmatprep.subr.bf16.mxu0 0
    %135 = vmatpush1.bf16.msra.mxu0 0
    %136 = vmatprep.mubr.bf16.mxu0 0
    %137 = vmatmul.mubr.bf16.gmra.mrb[0].mxu0 %v99
    %v138 = vpop.f32.mrb[0].mxu0
    %v139 = vadd.f32 %v61, %v138
    %v140 = vpop.f32.mrb[0].mxu0
    %v141 = vpop.f32.mrb[0].mxu0
    %v142 = vadd.f32 %v61, %v141
    %v143 = vpop.f32.mrb[0].mxu0
    %144 = vmatprep.mubr.bf16.mxu0 0
    %145 = vmatmul.mubr.bf16.gmra.mrb[0].mxu0 %v102
    %v146 = vpop.f32.mrb[0].mxu0
    %v147 = vadd.f32 %v61, %v146
    %v148 = vpop.f32.mrb[0].mxu0
    %v149 = vpop.f32.mrb[0].mxu0
    %v150 = vadd.f32 %v61, %v149
    %v151 = vpop.f32.mrb[0].mxu0
    %152 = vdwg.mxu0
    %153 = vst [vmem:[#allocation7] sm:$0xff] %v139
    %154 = vst [vmem:[#allocation7 + $0x8] sm:$0xff] %v142
    %155 = vst [vmem:[#allocation7 + $0x10] sm:$0xff] %v147
    %156 = vst [vmem:[#allocation7 + $0x18] sm:$0xff] %v150
    // Predicated region
    $region22: #{tpu_custom_call.1} parent=1 // pred_check
      _
    $region23: #{tpu_custom_call.1} parent=1 // pred_check_branch
      %158 = sbr.rel (0) target = $region25
    $region24: #{tpu_custom_call.1} parent=1 // pred_region
      %s160 = ssub.s32 512, 512
      %161 = vsyncadd [#allocation4], %s160
      %s162 = sshll.u32 [#allocation7], 4
      %s163 = int_to_ptr.vmem [resolvable:$true] %s162
      %168 = dma.vmem_to_hbm [thread:$0]  %s163, 512, %s3, [#allocation4], 128, 128, 8
    $region25: #{tpu_custom_call.1} parent=1 // pred_fallthru
      _
    // Predicated region
    $region26: #{tpu_custom_call.1} parent=1 // pred_check
      _
    $region27: #{tpu_custom_call.1} parent=1 // pred_check_branch
      %170 = sbr.rel (0) target = $region29
    $region28: #{tpu_custom_call.1} parent=1 // pred_region
      %171 = dma.done [#allocation4], 512
    $region29: #{tpu_custom_call.1} parent=1 // pred_fallthru
      _
    %172 = vsyncpa [#allocation3], 1
    %173 = vsyncpa [#allocation6], 1
    %174 = vsyncpa [#allocation4], 1

</llo_original>
